<compile_context>
chip_gen: v7x
topology: tpu7x:2x2x1
jax: 0.10.0
libtpu: 0.0.40
codegen_flags: <defaults>
</compile_context>

<pallas_src>
import functools

import jax
import jax.numpy as jnp
from jax import lax
from jax.experimental import pallas as pl
from jax.experimental.pallas import tpu as pltpu

NEG_SLOPE = 0.01  # torch.nn.LeakyReLU default negative_slope


def _pool_sum_max_kernel(x_ref, sum_ref, max_ref, sum_sc, max_sc, *, hw, tile_hw):
    """Per-(batch, channel) running sum & max over the spatial (H*W) axis.

    x_ref   : VMEM (TB, TC, tile_hw)  one HW tile of TB batch rows, TC channels
    sum_ref : VMEM (TB, 1, TC) f32    pooled sum   (written on last HW tile)
    max_ref : VMEM (TB, 1, TC) f32    pooled max   (written on last HW tile)
    sum_sc / max_sc : VMEM (TB, TC) f32 running accumulators
    """
    t = pl.program_id(2)
    n_t = pl.num_programs(2)
    rem = hw % tile_hw  # static: ragged width of the last (partial) tile

    @pl.when(t == 0)
    def _init():
        sum_sc[...] = jnp.zeros_like(sum_sc)
        max_sc[...] = jnp.full_like(max_sc, -jnp.inf)

    x = x_ref[...]  # (TB, TC, tile_hw), native dtype

    def _update(x_for_sum, x_for_max):
        sum_sc[...] += jnp.sum(x_for_sum, axis=-1, dtype=jnp.float32)
        max_sc[...] = jnp.maximum(max_sc[...],
                                  jnp.max(x_for_max, axis=-1).astype(jnp.float32))

    if rem == 0:
        _update(x, x)
    else:
        # Only the last HW tile contains unspecified out-of-bounds lanes.
        @pl.when(t < n_t - 1)
        def _full_tile():
            _update(x, x)

        @pl.when(t == n_t - 1)
        def _ragged_tile():
            col = lax.broadcasted_iota(jnp.int32, (1, 1, tile_hw), 2)
            valid = col < rem  # (1, 1, tile_hw), broadcasts against x
            if jnp.issubdtype(x.dtype, jnp.floating):
                lo = jnp.asarray(-jnp.inf, dtype=x.dtype)
            else:
                lo = jnp.asarray(jnp.iinfo(x.dtype).min, dtype=x.dtype)
            zero = jnp.asarray(0, dtype=x.dtype)
            _update(jnp.where(valid, x, zero), jnp.where(valid, x, lo))

    @pl.when(t == n_t - 1)
    def _finalize():
        sum_ref[:, 0, :] = sum_sc[...]
        max_ref[:, 0, :] = max_sc[...]


def _vmem_capacity_bytes():
    try:
        cap = getattr(pltpu.get_tpu_info(), "vmem_capacity_bytes", None)
        if cap:
            return int(cap)
    except Exception:
        pass
    return 64 * 1024 * 1024  # conservative default (v7x per-TensorCore)


def _largest_divisor_leq(n, cap):
    cap = max(1, min(n, int(cap)))
    for d in range(cap, 0, -1):
        if n % d == 0:
            return d
    return 1


def channel_attention(x, weight, kernel_size, *, tile_hw=None, batch_block=None):
    """x: (B, C, H, W), weight: conv1d weight (kernel_size,) -> (B, C, H, W)."""
    B, C, H, W = x.shape
    hw = H * W
    dtype_bytes = jnp.dtype(x.dtype).itemsize
    x_flat = x.reshape(B, C, hw)  # contiguous reshape: free

    # ---- generation-aware sizing -------------------------------------------
    vmem_cap = _vmem_capacity_bytes()
    small_vmem = vmem_cap <= 64 * 1024 * 1024          # v7x-class parts
    per_buf_budget = (8 << 20) if small_vmem else (16 << 20)
    vmem_ceiling = (32 << 20) if small_vmem else (64 << 20)

    # ---- spatial tile: lane-dense multiple of 128, or the full HW extent ----
    if tile_hw is None:
        max_hw = max(128, (per_buf_budget // max(C * dtype_bytes, 1)) // 128 * 128)
        tile_hw = hw if hw <= max_hw else max_hw
    n_t = pl.cdiv(hw, tile_hw)

    # ---- fold batch rows into one block (amortize per-step overhead) --------
    if batch_block is None:
        tb_cap = per_buf_budget // max(C * tile_hw * dtype_bytes, 1)
        batch_block = _largest_divisor_leq(B, tb_cap)
    TB = batch_block
    n_b = B // TB

    # ---- split C for megacore when the parallel axes would have one block ---
    n_c = 1
    if n_b == 1 and n_t >= 2 and C % 256 == 0:
        n_c = 2
    TC = C // n_c

    step_bytes = TB * TC * tile_hw * dtype_bytes
    need = 2 * step_bytes + 8 * TB * TC * 4 + (2 << 20)
    vmem_limit = int(min(vmem_ceiling, max(need, 8 << 20)))

    kernel = functools.partial(_pool_sum_max_kernel, hw=hw, tile_hw=tile_hw)

    pooled_sum, pooled_max = pl.pallas_call(
        kernel,
        out_shape=(jax.ShapeDtypeStruct((B, 1, C), jnp.float32),
                   jax.ShapeDtypeStruct((B, 1, C), jnp.float32)),
        grid_spec=pltpu.PrefetchScalarGridSpec(
            num_scalar_prefetch=0,
            grid=(n_b, n_c, n_t),
            in_specs=[pl.BlockSpec((TB, TC, tile_hw), lambda b, c, t: (b, c, t))],
            out_specs=[pl.BlockSpec((TB, 1, TC), lambda b, c, t: (b, 0, c)),
                       pl.BlockSpec((TB, 1, TC), lambda b, c, t: (b, 0, c))],
            scratch_shapes=[pltpu.VMEM((TB, TC), jnp.float32),   # running sum
                            pltpu.VMEM((TB, TC), jnp.float32)],  # running max
        ),
        compiler_params=pltpu.CompilerParams(
            dimension_semantics=("parallel", "parallel", "arbitrary"),
            vmem_limit_bytes=vmem_limit,
        ),
        cost_estimate=pl.CostEstimate(
            flops=2 * B * C * hw,
            transcendentals=0,
            bytes_accessed=B * C * hw * dtype_bytes + 2 * B * C * 4,
        ),
    )(x_flat)

    # ---- tiny O(B*C*K) epilogue in plain XLA (per perf review) --------------
    avg = pooled_sum[:, 0, :] * (1.0 / hw)   # (B, C) f32
    mx = pooled_max[:, 0, :]                 # (B, C) f32
    pad = kernel_size // 2
    w = weight.reshape(-1).astype(jnp.float32)

    def conv1d_leaky(v):
        padded = jnp.pad(v, ((0, 0), (pad, pad)))
        out = jnp.zeros_like(v)
        for j in range(kernel_size):
            out = out + w[j] * padded[:, j:j + C]
        return jnp.where(out >= 0, out, NEG_SLOPE * out)

    att = jax.nn.sigmoid(conv1d_leaky(avg) + conv1d_leaky(mx))   # (B, C)
    # expand_as(x): free broadcast done by the consumer, never written to HBM.
    return jnp.broadcast_to(att.astype(x.dtype)[:, :, None, None], x.shape)


def channel_attention_ref(x, weight, kernel_size):
    """Pure-JAX reference matching the PyTorch module."""
    B, C, H, W = x.shape
    avg = jnp.mean(x.astype(jnp.float32), axis=(2, 3))
    mx = jnp.max(x.astype(jnp.float32), axis=(2, 3))
    pad = kernel_size // 2
    w = weight.reshape(-1).astype(jnp.float32)

    def conv1d_leaky(v):
        padded = jnp.pad(v, ((0, 0), (pad, pad)))
        out = jnp.zeros_like(v)
        for j in range(kernel_size):
            out = out + w[j] * padded[:, j:j + C]
        return jnp.where(out >= 0, out, NEG_SLOPE * out)

    att = jax.nn.sigmoid(conv1d_leaky(avg) + conv1d_leaky(mx))
    return jnp.broadcast_to(att.astype(x.dtype)[:, :, None, None], x.shape)


def _run_case(key, B, C, H, W, kernel_size, **kw):
    kx, kw_ = jax.random.split(key)
    x = jax.random.normal(kx, (B, C, H, W), dtype=jnp.float32)
    weight = (jax.random.uniform(kw_, (kernel_size,), dtype=jnp.float32,
                                 minval=-1.0, maxval=1.0)
              / jnp.sqrt(float(kernel_size)))
    out = jax.block_until_ready(channel_attention(x, weight, kernel_size, **kw))
    ref = channel_attention_ref(x, weight, kernel_size)
    assert out.shape == x.shape
    assert jnp.allclose(out, ref, atol=1e-5, rtol=1e-5), (
        f"mismatch vs reference for shape {(B, C, H, W)}")


if __name__ == "__main__":
    key = jax.random.PRNGKey(0)
    k1, k2, k3, k4 = jax.random.split(key, 4)

    # Base case: single full-HW tile, batch folded into one block.
    _run_case(k1, B=2, C=8, H=16, W=16, kernel_size=3)
    # Multi-tile accumulation path (forced 128-wide HW tiles).
    _run_case(k2, B=2, C=8, H=16, W=16, kernel_size=3, tile_hw=128)
    # Ragged last tile (H*W = 196 not a multiple of 128) -> masked sum/max path.
    _run_case(k3, B=2, C=16, H=14, W=14, kernel_size=5, tile_hw=128)
    # B == 1 with C % 256 == 0 and >= 2 HW tiles -> channel-split (megacore) path.
    _run_case(k4, B=1, C=256, H=32, W=32, kernel_size=3, tile_hw=512)

    print("KERNEL_OK")
</pallas_src>

<mosaic_0001>
module attributes {stable_mosaic.version = 11 : i64} {
  func.func @_pool_sum_max_kernel(%arg0: i32, %arg1: i32, %arg2: i32, %arg3: memref<2x8x256xf32, #tpu.memory_space<vmem>>, %arg4: memref<2x1x8xf32, #tpu.memory_space<vmem>>, %arg5: memref<2x1x8xf32, #tpu.memory_space<vmem>>, %arg6: memref<2x8xf32, #tpu.memory_space<vmem>>, %arg7: memref<2x8xf32, #tpu.memory_space<vmem>>) attributes {dimension_semantics = [#tpu.dimension_semantics<parallel>, #tpu.dimension_semantics<parallel>, #tpu.dimension_semantics<arbitrary>], iteration_bounds = array<i64: 1, 1, 1>, scalar_prefetch = 0 : i64, scratch_operands = 2 : i64, tpu.core_type = #tpu.core_type<tc>, window_params = [{transform_indices = @transform_0, window_bounds = array<i64: 2, 8, 256>}, {transform_indices = @transform_1, window_bounds = array<i64: 2, 1, 8>}, {transform_indices = @transform_2, window_bounds = array<i64: 2, 1, 8>}]} {
    %c0_i32 = arith.constant 0 : i32
    %0 = arith.cmpi eq, %arg2, %c0_i32 : i32
    %1 = arith.extui %0 : i1 to i32
    %c0_i32_0 = arith.constant 0 : i32
    %2 = arith.cmpi ne, %1, %c0_i32_0 : i32
    scf.if %2 {
      %cst_14 = arith.constant 0.000000e+00 : f32
      %15 = vector.broadcast %cst_14 : f32 to vector<2x8xf32>
      %c0_15 = arith.constant 0 : index
      %c0_16 = arith.constant 0 : index
      %16 = vector.load %arg6[%c0_15, %c0_16] : memref<2x8xf32, #tpu.memory_space<vmem>>, vector<2x8xf32>
      tpu.vector_store %arg6[%c0_15, %c0_16], %15 {strides = array<i32>} : memref<2x8xf32, #tpu.memory_space<vmem>>, vector<2x8xf32>,
      %cst_17 = arith.constant 0xFF800000 : f32
      %17 = vector.broadcast %cst_17 : f32 to vector<2x8xf32>
      %c0_18 = arith.constant 0 : index
      %c0_19 = arith.constant 0 : index
      %18 = vector.load %arg7[%c0_18, %c0_19] : memref<2x8xf32, #tpu.memory_space<vmem>>, vector<2x8xf32>
      tpu.vector_store %arg7[%c0_18, %c0_19], %17 {strides = array<i32>} : memref<2x8xf32, #tpu.memory_space<vmem>>, vector<2x8xf32>,
    } else {
    }
    %c0 = arith.constant 0 : index
    %c0_1 = arith.constant 0 : index
    %c0_2 = arith.constant 0 : index
    %3 = vector.load %arg3[%c0, %c0_1, %c0_2] : memref<2x8x256xf32, #tpu.memory_space<vmem>>, vector<2x8x256xf32>
    %c0_3 = arith.constant 0 : index
    %c0_4 = arith.constant 0 : index
    %4 = vector.load %arg6[%c0_3, %c0_4] : memref<2x8xf32, #tpu.memory_space<vmem>>, vector<2x8xf32>
    %cst = arith.constant dense<0.000000e+00> : vector<2x8xf32>
    %5 = vector.multi_reduction <add>, %3, %cst [2] : vector<2x8x256xf32> to vector<2x8xf32>
    %6 = arith.addf %4, %5 : vector<2x8xf32>
    %c0_5 = arith.constant 0 : index
    %c0_6 = arith.constant 0 : index
    %7 = vector.load %arg6[%c0_5, %c0_6] : memref<2x8xf32, #tpu.memory_space<vmem>>, vector<2x8xf32>
    tpu.vector_store %arg6[%c0_5, %c0_6], %6 {strides = array<i32>} : memref<2x8xf32, #tpu.memory_space<vmem>>, vector<2x8xf32>,
    %c0_7 = arith.constant 0 : index
    %c0_8 = arith.constant 0 : index
    %8 = vector.load %arg7[%c0_7, %c0_8] : memref<2x8xf32, #tpu.memory_space<vmem>>, vector<2x8xf32>
    %cst_9 = arith.constant dense<0xFF800000> : vector<2x8xf32>
    %9 = vector.multi_reduction <maximumf>, %3, %cst_9 [2] : vector<2x8x256xf32> to vector<2x8xf32>
    %10 = arith.maximumf %8, %9 : vector<2x8xf32>
    %c0_10 = arith.constant 0 : index
    %c0_11 = arith.constant 0 : index
    %11 = vector.load %arg7[%c0_10, %c0_11] : memref<2x8xf32, #tpu.memory_space<vmem>>, vector<2x8xf32>
    tpu.vector_store %arg7[%c0_10, %c0_11], %10 {strides = array<i32>} : memref<2x8xf32, #tpu.memory_space<vmem>>, vector<2x8xf32>,
    %c0_i32_12 = arith.constant 0 : i32
    %12 = arith.cmpi eq, %arg2, %c0_i32_12 : i32
    %13 = arith.extui %12 : i1 to i32
    %c0_i32_13 = arith.constant 0 : i32
    %14 = arith.cmpi ne, %13, %c0_i32_13 : i32
    scf.if %14 {
      %c0_14 = arith.constant 0 : index
      %c0_15 = arith.constant 0 : index
      %15 = vector.load %arg6[%c0_14, %c0_15] : memref<2x8xf32, #tpu.memory_space<vmem>>, vector<2x8xf32>
      %c0_16 = arith.constant 0 : index
      %c0_17 = arith.constant 0 : index
      %c0_18 = arith.constant 0 : index
      %16 = vector.load %arg4[%c0_16, %c0_17, %c0_18] : memref<2x1x8xf32, #tpu.memory_space<vmem>>, vector<2x1x8xf32>
      %17 = vector.shape_cast %16 : vector<2x1x8xf32> to vector<2x8xf32>
      %18 = vector.shape_cast %15 : vector<2x8xf32> to vector<2x1x8xf32>
      tpu.vector_store %arg4[%c0_16, %c0_17, %c0_18], %18 {strides = array<i32>} : memref<2x1x8xf32, #tpu.memory_space<vmem>>, vector<2x1x8xf32>,
      %c0_19 = arith.constant 0 : index
      %c0_20 = arith.constant 0 : index
      %19 = vector.load %arg7[%c0_19, %c0_20] : memref<2x8xf32, #tpu.memory_space<vmem>>, vector<2x8xf32>
      %c0_21 = arith.constant 0 : index
      %c0_22 = arith.constant 0 : index
      %c0_23 = arith.constant 0 : index
      %20 = vector.load %arg5[%c0_21, %c0_22, %c0_23] : memref<2x1x8xf32, #tpu.memory_space<vmem>>, vector<2x1x8xf32>
      %21 = vector.shape_cast %20 : vector<2x1x8xf32> to vector<2x8xf32>
      %22 = vector.shape_cast %19 : vector<2x8xf32> to vector<2x1x8xf32>
      tpu.vector_store %arg5[%c0_21, %c0_22, %c0_23], %22 {strides = array<i32>} : memref<2x1x8xf32, #tpu.memory_space<vmem>>, vector<2x1x8xf32>,
    } else {
    }
    return
  }
  func.func @transform_0(%arg0: i32, %arg1: i32, %arg2: i32) -> (i32, i32, i32) {
    %c0_i32 = arith.constant 0 : i32
    return %arg0, %arg1, %arg2 : i32, i32, i32
  }
  func.func @transform_1(%arg0: i32, %arg1: i32, %arg2: i32) -> (i32, i32, i32) {
    %c0_i32 = arith.constant 0 : i32
    %c0_i32_0 = arith.constant 0 : i32
    return %arg0, %c0_i32, %arg1 : i32, i32, i32
  }
  func.func @transform_2(%arg0: i32, %arg1: i32, %arg2: i32) -> (i32, i32, i32) {
    %c0_i32 = arith.constant 0 : i32
    %c0_i32_0 = arith.constant 0 : i32
    return %arg0, %c0_i32, %arg1 : i32, i32, i32
  }
}

</mosaic_0001>

<llo_original>
// kernel: tpu_custom_call.1
$region0: #{tpu_custom_call.1}
  #allocation0 [shape = 'u32[]', space=smem, size = 0x4, offset = 0x4, fixed_abs, tag = 'smem constant byte address 0x4 - core index']
  #allocation1 [shape = 'u32[144,128]{1,0:T(1,128)}', space=vmem, size = 0x12000, scoped, tag = 'internal scratch']
  #allocation2 [shape = 'f32[2,8]{1,0:T(2,128)}', space=vmem, size = 0x400, scoped, tag = 'scratch operand']
  #allocation3 [shape = 'f32[2,8]{1,0:T(2,128)}', space=vmem, size = 0x400, scoped, tag = 'scratch operand']
  %s0 = inlined_call_operand.hbm [shape: f32[2,8,256], index: 0, kind: input, shape index: {}]
  %s1 = inlined_call_operand.hbm [shape: f32[2,1,8], index: 1, kind: output, shape index: {0}]
  %s2 = inlined_call_operand.hbm [shape: f32[2,1,8], index: 2, kind: output, shape index: {1}]
  %3 = xla_tuple %s1, %s2
  %s4 = sld [smem:[#allocation0]]
  $region34: #{tpu_custom_call.1} parent=0
    _
  %s6 = ssub.s32 1, %s4
  %s7 = scalar_select 0, %s6, %s4
  $region1: #{tpu_custom_call.1} parent=0
    #allocation4 [shape = 'u8[16384]{0}', space=vmem, size = 0x4000, scoped, tag = 'input window, operand 0, single buffered']
    #allocation5 [shape = 's32[1]{0}', space=sflag, size = 0x4, scoped, tag = 'scoped memory for tpu_custom_call.1']
    #allocation6 [shape = 's32[1]{0}', space=sflag, size = 0x4, scoped, tag = 'scoped memory for tpu_custom_call.1']
    #allocation7 [shape = 'u8[1024]{0}', space=vmem, size = 0x400, scoped, tag = 'output window, operand 0, single buffered']
    #allocation8 [shape = 'u8[1024]{0}', space=vmem, size = 0x400, scoped, tag = 'output window, operand 1, single buffered']
    #allocation9 [shape = 's32[1]{0}', space=sflag, size = 0x4, scoped, tag = 'scoped memory for tpu_custom_call.1']
    %8 = vsyncpa [#allocation5], 0
    %9 = vsyncpa [#allocation6], 0
    %10 = vsyncpa [#allocation9], 0
    // Predicated region
    $region2: #{tpu_custom_call.1} parent=1 // pred_check
      _
    $region3: #{tpu_custom_call.1} parent=1 // pred_check_branch
      %12 = sbr.rel (0) target = $region5
    $region4: #{tpu_custom_call.1} parent=1 // pred_region
      %s14 = ssub.s32 512, 512
      %15 = vsyncadd [#allocation5], %s14
      %s16 = sshll.u32 [#allocation4], 4
      %s17 = int_to_ptr.vmem [resolvable:$true] %s16
      %22 = dma.hbm_to_vmem [thread:$0]  %s0, 512, %s17, [#allocation5], 256, 256, 16
    $region5: #{tpu_custom_call.1} parent=1 // pred_fallthru
      _
    // Predicated region
    $region6: #{tpu_custom_call.1} parent=1 // pred_check
      _
    $region7: #{tpu_custom_call.1} parent=1 // pred_check_branch
      %24 = sbr.rel (0) target = $region9
    $region8: #{tpu_custom_call.1} parent=1 // pred_region
      %25 = dma.done [#allocation5], 512
    $region9: #{tpu_custom_call.1} parent=1 // pred_fallthru
      _
    %p26 = scmp.eq.s32.totalorder 0, 0
    // Predicated region
    $region10: #{tpu_custom_call.1} parent=1 // pred_check
      %p27 = pneg %p26
    $region11: #{tpu_custom_call.1} parent=1 // pred_check_branch
      %29 = sbr.rel (%p27) target = $region13
    $region12: #{tpu_custom_call.1} parent=1 // pred_region
      %vm30 = vcmask 58368
      %31 = vst.msk [vmem:[#allocation2] sm:$0x3] %vm30, 0.0
      %32 = vst.msk [vmem:[#allocation3] sm:$0x3] %vm30, -inf
    $region13: #{tpu_custom_call.1} parent=1 // pred_fallthru
      _
    %v33 = vld [vmem:[#allocation4] sm:$0xff]
    %v34 = vld [vmem:[#allocation4 + $0x8] sm:$0xff]
    %v35 = vld [vmem:[#allocation4 + $0x10] sm:$0xff]
    %v36 = vld [vmem:[#allocation4 + $0x18] sm:$0xff]
    %v37 = vld [vmem:[#allocation2] sm:$0x3]
    %v38 = vadd.f32 %v33, %v34
    %39 = vadd.xlane.f32.xlu0 %v38
    %v40 = vpop.xlane.xlu0 %39
    %v41 = vadd.f32 %v35, %v36
    %42 = vadd.xlane.f32.xlu0 %v41
    %v43 = vpop.xlane.xlu0 %42
    %v46 = vlaneseq
    %v47 = vand.u32 %v46, 127
    %v48 = vlaneseq
    %v49 = vshrl.u32 %v48, 7
    %v50 = vsub.s32 %v47, %v49
    %v51 = vrot.slane %v40, %v50
    %v52 = vlaneseq
    %v53 = vshrl.u32 %v52, 7
    %v54 = vsub.s32 %v47, %v53
    %v55 = vrot.slane %v43, %v54
    %vm56 = vcmask 1041409
    %v57 = vsel %vm56, %v55, %v51
    %v59 = vadd.f32 %v37, %v57
    %vm60 = vcmask 58368
    %61 = vst.msk [vmem:[#allocation2] sm:$0x3] %vm60, %v59
    %v62 = vld [vmem:[#allocation3] sm:$0x3]
    %v63 = vmax.f32 %v33, %v34
    %64 = vmax.xlane.f32.xlu0 %v63
    %v65 = vpop.xlane.xlu0 %64
    %v66 = vmax.f32 %v35, %v36
    %67 = vmax.xlane.f32.xlu0 %v66
    %v68 = vpop.xlane.xlu0 %67
    %v71 = vlaneseq
    %v72 = vshrl.u32 %v71, 7
    %v73 = vsub.s32 %v47, %v72
    %v74 = vrot.slane %v65, %v73
    %v75 = vlaneseq
    %v76 = vshrl.u32 %v75, 7
    %v77 = vsub.s32 %v47, %v76
    %v78 = vrot.slane %v68, %v77
    %v79 = vsel %vm56, %v78, %v74
    %v81 = vmax.f32 %v62, %v79
    %82 = vst.msk [vmem:[#allocation3] sm:$0x3] %vm60, %v81
    // Predicated region
    $region14: #{tpu_custom_call.1} parent=1 // pred_check
      %p83 = pneg %p26
    $region15: #{tpu_custom_call.1} parent=1 // pred_check_branch
      %85 = sbr.rel (%p83) target = $region17
    $region16: #{tpu_custom_call.1} parent=1 // pred_region
      %v86 = vld [vmem:[#allocation2] sm:$0x3]
      %v89 = vunpack.c.l.s4 1966171168
      %v90 = vunpack.c.0.s8 %v89
      %v91 = vlaneseq
      %v92 = vshrl.u32 %v91, 7
      %v93 = vsub.s32 %v90, %v92
      %v94 = vrot.slane %v86, %v93
      %v95 = vcombine.high %v94, %v94
      %v97 = vunpack.c.l.s4 1966171168
      %v98 = vunpack.c.0.s8 %v97
      %v99 = vlaneseq
      %v100 = vshrl.u32 %v99, 7
      %v101 = vsub.s32 %v98, %v100
      %v102 = vrot.slane %v94, %v101
      %v104 = vunpack.c.l.s4 1966171168
      %v105 = vunpack.c.0.s8 %v104
      %v106 = vlaneseq
      %v107 = vshrl.u32 %v106, 7
      %v108 = vsub.s32 %v105, %v107
      %v109 = vrot.slane %v95, %v108
      %vm112 = vcmask 57344
      %113 = vst.msk [vmem:[#allocation7] sm:$0x1] %vm112, %v102
      %114 = vst.msk [vmem:[#allocation7 + $0x1] sm:$0x1] %vm112, %v109
      %v115 = vld [vmem:[#allocation3] sm:$0x3]
      %v118 = vunpack.c.l.s4 1966171168
      %v119 = vunpack.c.0.s8 %v118
      %v120 = vlaneseq
      %v121 = vshrl.u32 %v120, 7
      %v122 = vsub.s32 %v119, %v121
      %v123 = vrot.slane %v115, %v122
      %v124 = vcombine.high %v123, %v123
      %v126 = vunpack.c.l.s4 1966171168
      %v127 = vunpack.c.0.s8 %v126
      %v128 = vlaneseq
      %v129 = vshrl.u32 %v128, 7
      %v130 = vsub.s32 %v127, %v129
      %v131 = vrot.slane %v123, %v130
      %v133 = vunpack.c.l.s4 1966171168
      %v134 = vunpack.c.0.s8 %v133
      %v135 = vlaneseq
      %v136 = vshrl.u32 %v135, 7
      %v137 = vsub.s32 %v134, %v136
      %v138 = vrot.slane %v124, %v137
      %141 = vst.msk [vmem:[#allocation8] sm:$0x1] %vm112, %v131
      %142 = vst.msk [vmem:[#allocation8 + $0x1] sm:$0x1] %vm112, %v138
    $region17: #{tpu_custom_call.1} parent=1 // pred_fallthru
      _
    // Predicated region
    $region18: #{tpu_custom_call.1} parent=1 // pred_check
      _
    $region19: #{tpu_custom_call.1} parent=1 // pred_check_branch
      %144 = sbr.rel (0) target = $region21
    $region20: #{tpu_custom_call.1} parent=1 // pred_region
      %s146 = ssub.s32 32, 32
      %147 = vsyncadd [#allocation6], %s146
      %s148 = sshll.u32 [#allocation7], 4
      %s149 = int_to_ptr.vmem [resolvable:$true] %s148
      %154 = dma.vmem_to_hbm [thread:$0]  %s149, 32, %s1, [#allocation6], 16, 16, 1
    $region21: #{tpu_custom_call.1} parent=1 // pred_fallthru
      _
    // Predicated region
    $region22: #{tpu_custom_call.1} parent=1 // pred_check
      _
    $region23: #{tpu_custom_call.1} parent=1 // pred_check_branch
      %156 = sbr.rel (0) target = $region25
    $region24: #{tpu_custom_call.1} parent=1 // pred_region
      %s158 = ssub.s32 32, 32
      %159 = vsyncadd [#allocation9], %s158
      %s160 = sshll.u32 [#allocation8], 4
      %s161 = int_to_ptr.vmem [resolvable:$true] %s160
      %166 = dma.vmem_to_hbm [thread:$0]  %s161, 32, %s2, [#allocation9], 16, 16, 1
    $region25: #{tpu_custom_call.1} parent=1 // pred_fallthru
      _
    // Predicated region
    $region26: #{tpu_custom_call.1} parent=1 // pred_check
      _
    $region27: #{tpu_custom_call.1} parent=1 // pred_check_branch
      %168 = sbr.rel (0) target = $region29
    $region28: #{tpu_custom_call.1} parent=1 // pred_region
      %169 = dma.done [#allocation6], 32
    $region29: #{tpu_custom_call.1} parent=1 // pred_fallthru
      _
    // Predicated region
    $region30: #{tpu_custom_call.1} parent=1 // pred_check
      _
    $region31: #{tpu_custom_call.1} parent=1 // pred_check_branch
      %171 = sbr.rel (0) target = $region33
    $region32: #{tpu_custom_call.1} parent=1 // pred_region
      %172 = dma.done [#allocation9], 32
    $region33: #{tpu_custom_call.1} parent=1 // pred_fallthru
      _
    %173 = vsyncpa [#allocation5], 1
    %174 = vsyncpa [#allocation6], 1
    %175 = vsyncpa [#allocation9], 1

</llo_original>
